<compile_context>
chip_gen: v5e
topology: v5e:2x2
jax: 0.10.0
libtpu: 0.0.40
codegen_flags: <defaults>
</compile_context>

<pallas_src>
import functools

import jax
import jax.numpy as jnp
from jax import lax
from jax.experimental import pallas as pl
from jax.experimental.pallas import tpu as pltpu


def _round_up(x: int, m: int) -> int:
    return ((x + m - 1) // m) * m


def _rbf_kernel(d_ref, o_ref, *, gamma: float, vmin: float, step: float):
    # d_ref: (1, TILE_N) distances (lane vector); o_ref: (bins, TILE_N).
    bins, tn = o_ref.shape
    # centers[b] = vmin + b * step, broadcast along the 128-lane axis.
    b_idx = lax.broadcasted_iota(jnp.int32, (bins, tn), 0).astype(jnp.float32)
    centers = vmin + step * b_idx                      # (bins, TN)
    diff = d_ref[...] - centers                        # (1,TN)-(bins,TN) -> (bins,TN)
    o_ref[...] = jnp.exp(-gamma * diff * diff)         # EUP, lane-dense


def rbf_expansion(distance: jax.Array,
                  vmin: float = 0.0,
                  vmax: float = 8.0,
                  bins: int = 40,
                  lengthscale=None,
                  tile_n: int = 1024,
                  transposed: bool = False) -> jax.Array:
    """distance: (N,) or (N, 1) -> (N, bins) f32 (or (bins, N) if transposed)."""
    if distance.ndim == 2 and distance.shape[-1] == 1:
        distance = distance[:, 0]
    assert distance.ndim == 1, "distance must be (N,) or (N, 1)"
    distance = distance.astype(jnp.float32)
    n = distance.shape[0]

    step = (vmax - vmin) / (bins - 1)                  # mean(diff(centers))
    if lengthscale is None:
        gamma = 1.0 / step
    else:
        gamma = 1.0 / (lengthscale ** 2)

    # Lane-dense tiling: N on the 128-lane axis, padded to a tile multiple.
    tile_n = _round_up(min(tile_n, _round_up(n, 128)), 128)
    n_pad = _round_up(n, tile_n)
    d_row = jnp.pad(distance, (0, n_pad - n))[None, :]  # (1, n_pad)

    kernel = functools.partial(_rbf_kernel, gamma=float(gamma),
                               vmin=float(vmin), step=float(step))

    out_t = pl.pallas_call(
        kernel,
        out_shape=jax.ShapeDtypeStruct((bins, n_pad), jnp.float32),
        grid_spec=pltpu.PrefetchScalarGridSpec(
            num_scalar_prefetch=0,
            grid=(n_pad // tile_n,),
            in_specs=[pl.BlockSpec((1, tile_n), lambda i: (0, i))],
            out_specs=pl.BlockSpec((bins, tile_n), lambda i: (0, i)),
        ),
        compiler_params=pltpu.CompilerParams(
            dimension_semantics=("parallel",)),
    )(d_row)

    out_t = out_t[:, :n]                # drop padding -> (bins, N)
    if transposed:
        return out_t                    # lane-dense layout, preferred for fusion
    return out_t.T                      # (N, bins), matches the PyTorch module


def rbf_expansion_ref(distance, vmin=0.0, vmax=8.0, bins=40, lengthscale=None):
    if distance.ndim == 1:
        distance = distance[:, None]
    centers = jnp.linspace(vmin, vmax, bins, dtype=jnp.float32)
    if lengthscale is None:
        gamma = 1.0 / ((vmax - vmin) / (bins - 1))
    else:
        gamma = 1.0 / (lengthscale ** 2)
    return jnp.exp(-gamma * (distance - centers) ** 2)


if __name__ == "__main__":
    key = jax.random.PRNGKey(0)
    n_edges, bins = 64, 40
    # distances in [0, 8), like interatomic bond lengths
    distance = jax.random.uniform(key, (n_edges,), dtype=jnp.float32,
                                  minval=0.0, maxval=8.0)

    ref = rbf_expansion_ref(distance, vmin=0.0, vmax=8.0, bins=bins)

    # Default path: (N, bins), matches the PyTorch module contract.
    out = rbf_expansion(distance, vmin=0.0, vmax=8.0, bins=bins)
    out = jax.block_until_ready(out)
    assert out.shape == (n_edges, bins)
    assert jnp.allclose(out, ref, atol=1e-5, rtol=1e-5)

    # Lane-dense transposed path: (bins, N), as produced by the kernel.
    out_t = rbf_expansion(distance, vmin=0.0, vmax=8.0, bins=bins,
                          transposed=True)
    out_t = jax.block_until_ready(out_t)
    assert out_t.shape == (bins, n_edges)
    assert jnp.allclose(out_t, ref.T, atol=1e-5, rtol=1e-5)

    print("KERNEL_OK")
</pallas_src>

<mosaic_0001>
module attributes {stable_mosaic.version = 11 : i64} {
  func.func @_rbf_kernel(%arg0: i32, %arg1: memref<1x128xf32, #tpu.memory_space<vmem>>, %arg2: memref<40x128xf32, #tpu.memory_space<vmem>>) attributes {dimension_semantics = [#tpu.dimension_semantics<parallel>], iteration_bounds = array<i64: 1>, scalar_prefetch = 0 : i64, scratch_operands = 0 : i64, tpu.core_type = #tpu.core_type<tc>, window_params = [{transform_indices = @transform_0, window_bounds = array<i64: 1, 128>}, {transform_indices = @transform_1, window_bounds = array<i64: 40, 128>}]} {
    %0 = tpu.iota {dimensions = array<i32: 0>} : vector<40x128xi32>
    %1 = arith.sitofp %0 : vector<40x128xi32> to vector<40x128xf32>
    %cst = arith.constant 0.205128208 : f32
    %2 = vector.broadcast %cst : f32 to vector<40x128xf32>
    %3 = arith.mulf %2, %1 : vector<40x128xf32>
    %cst_0 = arith.constant 0.000000e+00 : f32
    %4 = vector.broadcast %cst_0 : f32 to vector<40x128xf32>
    %5 = arith.addf %4, %3 : vector<40x128xf32>
    %c0 = arith.constant 0 : index
    %c0_1 = arith.constant 0 : index
    %6 = vector.load %arg1[%c0, %c0_1] : memref<1x128xf32, #tpu.memory_space<vmem>>, vector<1x128xf32>
    %7 = vector.broadcast %6 : vector<1x128xf32> to vector<40x128xf32>
    %8 = arith.subf %7, %5 : vector<40x128xf32>
    %cst_2 = arith.constant -4.875000e+00 : f32
    %9 = vector.broadcast %cst_2 : f32 to vector<40x128xf32>
    %10 = arith.mulf %9, %8 : vector<40x128xf32>
    %11 = arith.mulf %10, %8 : vector<40x128xf32>
    %12 = math.exp %11 : vector<40x128xf32>
    %c0_3 = arith.constant 0 : index
    %c0_4 = arith.constant 0 : index
    %13 = vector.load %arg2[%c0_3, %c0_4] : memref<40x128xf32, #tpu.memory_space<vmem>>, vector<40x128xf32>
    tpu.vector_store %arg2[%c0_3, %c0_4], %12 {strides = array<i32>} : memref<40x128xf32, #tpu.memory_space<vmem>>, vector<40x128xf32>,
    return
  }
  func.func @transform_0(%arg0: i32) -> (i32, i32) {
    %c0_i32 = arith.constant 0 : i32
    %c0_i32_0 = arith.constant 0 : i32
    return %c0_i32, %arg0 : i32, i32
  }
  func.func @transform_1(%arg0: i32) -> (i32, i32) {
    %c0_i32 = arith.constant 0 : i32
    %c0_i32_0 = arith.constant 0 : i32
    return %c0_i32, %arg0 : i32, i32
  }
}

</mosaic_0001>

<llo_original>
// kernel: tpu_custom_call.1
$region0: #{tpu_custom_call.1}
  #allocation0 [shape = 'u32[]', space=smem, size = 0x4, offset = 0x4, fixed_abs, tag = 'smem constant byte address 0x4 - core index']
  #allocation1 [shape = 'u32[72,128]{1,0:T(1,128)}', space=vmem, size = 0x9000, scoped, tag = 'internal scratch']
  %s0 = inlined_call_operand.hbm [shape: f32[1,128], index: 0, kind: input, shape index: {}]
  %s1 = inlined_call_operand.hbm [shape: f32[40,128], index: 1, kind: output, shape index: {}]
  %s2 = sld [smem:[#allocation0]]
  $region18: #{tpu_custom_call.1} parent=0
    _
  %s4 = ssub.s32 1, %s2
  %s5 = scalar_select 0, %s4, %s2
  $region1: #{tpu_custom_call.1} parent=0
    #allocation2 [shape = 'u8[512]{0}', space=vmem, size = 0x400, scoped, tag = 'input window, operand 0, single buffered']
    #allocation3 [shape = 's32[1]{0}', space=sflag, size = 0x4, scoped, tag = 'scoped memory for tpu_custom_call.1']
    #allocation4 [shape = 's32[1]{0}', space=sflag, size = 0x4, scoped, tag = 'scoped memory for tpu_custom_call.1']
    #allocation5 [shape = 'u8[20480]{0}', space=vmem, size = 0x5000, scoped, tag = 'output window, operand 0, single buffered']
    %6 = vsyncpa [#allocation3], 0
    %7 = vsyncpa [#allocation4], 0
    // Predicated region
    $region2: #{tpu_custom_call.1} parent=1 // pred_check
      _
    $region3: #{tpu_custom_call.1} parent=1 // pred_check_branch
      %9 = sbr.rel (0) target = $region5
    $region4: #{tpu_custom_call.1} parent=1 // pred_region
      %11 = vsyncadd [#allocation3], 0
      %s13 = sshll.u32 %s0, 4
      %s14 = int_to_ptr.hbm [resolvable:$true] %s13
      %s15 = sshll.u32 [#allocation2], 4
      %s16 = int_to_ptr.vmem [resolvable:$true] %s15
      %18 = dma.hbm_to_vmem [thread:$0]  %s14, 16, %s16, [#allocation3]
    $region5: #{tpu_custom_call.1} parent=1 // pred_fallthru
      _
    // Predicated region
    $region6: #{tpu_custom_call.1} parent=1 // pred_check
      _
    $region7: #{tpu_custom_call.1} parent=1 // pred_check_branch
      %20 = sbr.rel (0) target = $region9
    $region8: #{tpu_custom_call.1} parent=1 // pred_region
      %22 = dma.done [#allocation3], 16
    $region9: #{tpu_custom_call.1} parent=1 // pred_fallthru
      _
    %v23 = vlaneseq
    %v24 = vshrl.u32 %v23, 7
    %v25 = vadd.s32 %v24, 8
    %v26 = vadd.s32 %v24, 16
    %v27 = vadd.s32 %v24, 24
    %v28 = vadd.s32 %v24, 32
    %v29 = vcvt.s32.f32 %v24
    %v30 = vcvt.s32.f32 %v25
    %v31 = vcvt.s32.f32 %v26
    %v32 = vcvt.s32.f32 %v27
    %v33 = vcvt.s32.f32 %v28
    %v34 = vmul.f32 %v29, 0.20512821
    %v35 = vmul.f32 %v30, 0.20512821
    %v36 = vmul.f32 %v31, 0.20512821
    %v37 = vmul.f32 %v32, 0.20512821
    %v38 = vmul.f32 %v33, 0.20512821
    %v39 = vadd.f32 %v34, 0.0
    %v40 = vadd.f32 %v35, 0.0
    %v41 = vadd.f32 %v36, 0.0
    %v42 = vadd.f32 %v37, 0.0
    %v43 = vadd.f32 %v38, 0.0
    %v44 = vld [vmem:[#allocation2] sm:$0x1]
    %v46 = vperm.slane %v44, 0
    %v48 = vsub.f32 %v46, %v39
    %v49 = vsub.f32 %v46, %v40
    %v50 = vsub.f32 %v46, %v41
    %v51 = vsub.f32 %v46, %v42
    %v52 = vsub.f32 %v46, %v43
    %v53 = vmul.f32 %v48, -4.875
    %v54 = vmul.f32 %v49, -4.875
    %v55 = vmul.f32 %v50, -4.875
    %v56 = vmul.f32 %v51, -4.875
    %v57 = vmul.f32 %v52, -4.875
    %v58 = vmul.f32 %v53, %v48
    %v59 = vmul.f32 %v54, %v49
    %v60 = vmul.f32 %v55, %v50
    %v61 = vmul.f32 %v56, %v51
    %v62 = vmul.f32 %v57, %v52
    %v63 = vmul.f32 %v58, 1.442695
    %v64 = vpow.pop %v63
    %v65 = vmul.f32 %v59, 1.442695
    %v66 = vpow.pop %v65
    %v67 = vmul.f32 %v60, 1.442695
    %v68 = vpow.pop %v67
    %v69 = vmul.f32 %v61, 1.442695
    %v70 = vpow.pop %v69
    %v71 = vmul.f32 %v62, 1.442695
    %v72 = vpow.pop %v71
    %73 = vst [vmem:[#allocation5] sm:$0xff] %v64
    %74 = vst [vmem:[#allocation5 + $0x8] sm:$0xff] %v66
    %75 = vst [vmem:[#allocation5 + $0x10] sm:$0xff] %v68
    %76 = vst [vmem:[#allocation5 + $0x18] sm:$0xff] %v70
    %77 = vst [vmem:[#allocation5 + $0x20] sm:$0xff] %v72
    // Predicated region
    $region10: #{tpu_custom_call.1} parent=1 // pred_check
      _
    $region11: #{tpu_custom_call.1} parent=1 // pred_check_branch
      %79 = sbr.rel (0) target = $region13
    $region12: #{tpu_custom_call.1} parent=1 // pred_region
      %81 = vsyncadd [#allocation4], 0
      %s82 = sshll.u32 [#allocation5], 4
      %s83 = int_to_ptr.vmem [resolvable:$true] %s82
      %s84 = sshll.u32 %s1, 4
      %s85 = int_to_ptr.hbm [resolvable:$true] %s84
      %90 = dma.vmem_to_hbm [thread:$0]  %s83, 640, %s85, [#allocation4], 128, 128, 8
    $region13: #{tpu_custom_call.1} parent=1 // pred_fallthru
      _
    // Predicated region
    $region14: #{tpu_custom_call.1} parent=1 // pred_check
      _
    $region15: #{tpu_custom_call.1} parent=1 // pred_check_branch
      %92 = sbr.rel (0) target = $region17
    $region16: #{tpu_custom_call.1} parent=1 // pred_region
      %94 = dma.done [#allocation4], 640
    $region17: #{tpu_custom_call.1} parent=1 // pred_fallthru
      _
    %95 = vsyncpa [#allocation3], 1
    %96 = vsyncpa [#allocation4], 1

</llo_original>
